<compile_context>
chip_gen: v7x
topology: tpu7x:2x2x1
jax: 0.10.0
libtpu: 0.0.40
codegen_flags: <defaults>
</compile_context>

<pallas_src>
import functools

import jax
import jax.numpy as jnp
from jax.experimental import pallas as pl
from jax.experimental.pallas import tpu as pltpu


def _round_up(n, m):
    return (n + m - 1) // m * m


def _fusionnet_kernel(x_ref, w1_ref, b1_ref, w2_ref, b2_ref, o_ref, *, precision):
    # x_ref : (in_dim, TB)      lane-dense batch tile
    # w1_ref: (hidden, in_dim)  PyTorch (out, in) layout, VMEM-resident
    # b1_ref: (hidden, 1)
    # w2_ref: (hidden, 1)       second-layer weights as a column
    # b2_ref: (1, 1)            scalar in SMEM
    # o_ref : (1, TB)
    # Layer 1 on the MXU: (hidden, in) @ (in, TB) -> (hidden, TB), f32 accumulate.
    h = jnp.dot(w1_ref[...], x_ref[...],
                preferred_element_type=jnp.float32, precision=precision)
    h = jnp.maximum(h + b1_ref[...], 0.0)
    # Layer 2 (hidden -> 1) on VPU + XLU: broadcast-mul then sublane reduce;
    # avoids an N=1 MXU matmul.
    out = jnp.sum(h * w2_ref[...], axis=0, keepdims=True) + b2_ref[0, 0]
    o_ref[...] = out.astype(o_ref.dtype)


def fusionnet_forward(x, w1, b1, w2, b2, *, block_b=65536, precision=None,
                      vmem_limit_bytes=48 * 1024 * 1024):
    """FusionNet forward pass.

    x : (B, 4) float32
    w1: (16, 4), b1: (16,), w2: (1, 16), b2: (1,)   (PyTorch nn.Linear layouts)
    Returns (B, 1) float32.
    """
    B, in_dim = x.shape
    hidden = w1.shape[0]

    # ---- batch tile on the lane axis (multiple of 128) ------------------------
    tb = min(_round_up(block_b, 128), _round_up(B, 128))
    # v7x megacore: make sure there are >=2 independent "parallel" batch tiles
    # whenever B allows, so both TensorCores get work.
    if B >= 2 * 128 and pl.cdiv(B, tb) < 2:
        tb = _round_up(pl.cdiv(B, 2), 128)
    grid = (pl.cdiv(B, tb),)  # partial last block instead of a padded HBM copy

    # Lane-dense layout: batch on the last (lane) axis.  Single relayout pass;
    # no jnp.pad pass (partial edge blocks handle the ragged tail).
    x_t = jnp.transpose(x.astype(jnp.float32))             # (in_dim, B)

    w1_f = w1.astype(jnp.float32)                           # (hidden, in_dim)
    b1_col = b1.reshape(hidden, 1).astype(jnp.float32)      # (hidden, 1)
    w2_col = jnp.transpose(w2).astype(jnp.float32)          # (hidden, 1)
    b2_s = b2.reshape(1, 1).astype(jnp.float32)             # (1, 1) -> SMEM

    flops = 2 * B * (in_dim * hidden + hidden)
    bytes_accessed = B * (in_dim + 1) * 4 + (hidden * in_dim + 2 * hidden + 1) * 4

    kernel = functools.partial(_fusionnet_kernel, precision=precision)

    out_t = pl.pallas_call(
        kernel,
        out_shape=jax.ShapeDtypeStruct((1, B), jnp.float32),
        grid_spec=pltpu.PrefetchScalarGridSpec(
            num_scalar_prefetch=0,
            grid=grid,
            in_specs=[
                # Per-step batch tile (auto double-buffered by Pallas).
                pl.BlockSpec((in_dim, tb), lambda i: (0, i)),
                # Weights / biases: constant index_map -> VMEM-resident across steps.
                pl.BlockSpec((hidden, in_dim), lambda i: (0, 0)),
                pl.BlockSpec((hidden, 1), lambda i: (0, 0)),
                pl.BlockSpec((hidden, 1), lambda i: (0, 0)),
                # Scalar output bias lives in SMEM.
                pl.BlockSpec(memory_space=pltpu.MemorySpace.SMEM),
            ],
            out_specs=pl.BlockSpec((1, tb), lambda i: (0, i)),
        ),
        compiler_params=pltpu.CompilerParams(
            # Batch tiles are independent -> shard across TensorCores on v7x.
            dimension_semantics=("parallel",),
            # Big tiles need more than the default scoped VMEM (v5e default 16 MiB);
            # 48 MiB is safe on all generations (<= v7x's 64 MiB/TC physical).
            vmem_limit_bytes=vmem_limit_bytes,
        ),
        cost_estimate=pl.CostEstimate(
            flops=flops, transcendentals=0, bytes_accessed=bytes_accessed),
    )(x_t, w1_f, b1_col, w2_col, b2_s)

    # Free metadata reshape (1, B) -> (B, 1); no transpose / slice copy.
    return out_t.reshape(B, 1)


def init_params(key, input_dim=4, hidden_dim=16):
    """Deterministic init mimicking torch.nn.Linear default (U(-1/sqrt(fan_in), +))."""
    k1, k2, k3, k4 = jax.random.split(key, 4)
    bound1 = 1.0 / jnp.sqrt(input_dim)
    bound2 = 1.0 / jnp.sqrt(hidden_dim)
    w1 = jax.random.uniform(k1, (hidden_dim, input_dim), jnp.float32, -bound1, bound1)
    b1 = jax.random.uniform(k2, (hidden_dim,), jnp.float32, -bound1, bound1)
    w2 = jax.random.uniform(k3, (1, hidden_dim), jnp.float32, -bound2, bound2)
    b2 = jax.random.uniform(k4, (1,), jnp.float32, -bound2, bound2)
    return w1, b1, w2, b2


def reference_forward(x, w1, b1, w2, b2):
    h = jnp.maximum(jnp.dot(x, w1.T, precision=jax.lax.Precision.HIGHEST) + b1, 0.0)
    return jnp.dot(h, w2.T, precision=jax.lax.Precision.HIGHEST) + b2


if __name__ == "__main__":
    key = jax.random.PRNGKey(0)
    k_x1, k_x2, k_x3, k_p = jax.random.split(key, 4)

    input_dim, hidden_dim = 4, 16
    params = init_params(k_p, input_dim, hidden_dim)

    # Tolerance sized for the MXU's default bf16-pass matmul precision; pass
    # precision=jax.lax.Precision.HIGHEST to fusionnet_forward for strict f32 parity.
    ATOL = RTOL = 1e-2

    # (1) Tiny batch: a single partial 128-lane tile (8 valid lanes).
    x1 = jax.random.normal(k_x1, (8, input_dim), jnp.float32)
    out1 = jax.block_until_ready(fusionnet_forward(x1, *params))
    ref1 = reference_forward(x1, *params)
    assert out1.shape == (8, 1)
    assert jnp.allclose(out1, ref1, atol=ATOL, rtol=RTOL), \
        float(jnp.max(jnp.abs(out1 - ref1)))

    # (2) Ragged batch with a small explicit tile: 3 grid steps, partial last block,
    #     VMEM-resident weights across steps (no padded HBM copy anywhere).
    x2 = jax.random.normal(k_x2, (300, input_dim), jnp.float32)
    out2 = jax.block_until_ready(fusionnet_forward(x2, *params, block_b=128))
    ref2 = reference_forward(x2, *params)
    assert out2.shape == (300, 1)
    assert jnp.allclose(out2, ref2, atol=ATOL, rtol=RTOL), \
        float(jnp.max(jnp.abs(out2 - ref2)))

    # (3) Default tile with the >=2-tile megacore split (512 -> two 256-lane tiles).
    x3 = jax.random.normal(k_x3, (512, input_dim), jnp.float32)
    out3 = jax.block_until_ready(fusionnet_forward(x3, *params))
    ref3 = reference_forward(x3, *params)
    assert out3.shape == (512, 1)
    assert jnp.allclose(out3, ref3, atol=ATOL, rtol=RTOL), \
        float(jnp.max(jnp.abs(out3 - ref3)))

    print("KERNEL_OK")
</pallas_src>

<mosaic_0001>
module attributes {stable_mosaic.version = 11 : i64} {
  func.func @_fusionnet_kernel(%arg0: i32, %arg1: memref<4x128xf32, #tpu.memory_space<vmem>>, %arg2: memref<16x4xf32, #tpu.memory_space<vmem>>, %arg3: memref<16x1xf32, #tpu.memory_space<vmem>>, %arg4: memref<16x1xf32, #tpu.memory_space<vmem>>, %arg5: memref<1x1xf32, #tpu.memory_space<smem>>, %arg6: memref<1x128xf32, #tpu.memory_space<vmem>>) attributes {dimension_semantics = [#tpu.dimension_semantics<parallel>], iteration_bounds = array<i64: 1>, scalar_prefetch = 0 : i64, scratch_operands = 0 : i64, tpu.core_type = #tpu.core_type<tc>, window_params = [{transform_indices = @transform_0, window_bounds = array<i64: 4, 128>}, {pipeline_mode = #tpu.pipeline_mode<synchronous>, transform_indices = @transform_1, window_bounds = array<i64: 16, 4>}, {pipeline_mode = #tpu.pipeline_mode<synchronous>, transform_indices = @transform_2, window_bounds = array<i64: 16, 1>}, {pipeline_mode = #tpu.pipeline_mode<synchronous>, transform_indices = @transform_3, window_bounds = array<i64: 16, 1>}, {transform_indices = @transform_4, window_bounds = array<i64: 1, 1>}, {transform_indices = @transform_5, window_bounds = array<i64: 1, 128>}]} {
    %c0 = arith.constant 0 : index
    %c0_0 = arith.constant 0 : index
    %0 = vector.load %arg2[%c0, %c0_0] : memref<16x4xf32, #tpu.memory_space<vmem>>, vector<16x4xf32>
    %c0_1 = arith.constant 0 : index
    %c0_2 = arith.constant 0 : index
    %1 = vector.load %arg1[%c0_1, %c0_2] : memref<4x128xf32, #tpu.memory_space<vmem>>, vector<4x128xf32>
    %cst = arith.constant dense<0.000000e+00> : vector<16x128xf32>
    %2 = tpu.matmul %0, %1, %cst {dimension_numbers = #tpu.dot_dimension_numbers<[1], [0], [0], [1], [0, 0, 1, 1], [], []>} : vector<16x4xf32>, vector<4x128xf32>, vector<16x128xf32> -> vector<16x128xf32>
    %c0_3 = arith.constant 0 : index
    %c0_4 = arith.constant 0 : index
    %3 = vector.load %arg3[%c0_3, %c0_4] : memref<16x1xf32, #tpu.memory_space<vmem>>, vector<16x1xf32>
    %4 = vector.broadcast %3 : vector<16x1xf32> to vector<16x128xf32>
    %5 = arith.addf %2, %4 : vector<16x128xf32>
    %cst_5 = arith.constant 0.000000e+00 : f32
    %6 = vector.broadcast %cst_5 : f32 to vector<16x128xf32>
    %7 = arith.maximumf %5, %6 : vector<16x128xf32>
    %c0_6 = arith.constant 0 : index
    %c0_7 = arith.constant 0 : index
    %8 = vector.load %arg4[%c0_6, %c0_7] : memref<16x1xf32, #tpu.memory_space<vmem>>, vector<16x1xf32>
    %9 = vector.broadcast %8 : vector<16x1xf32> to vector<16x128xf32>
    %10 = arith.mulf %7, %9 : vector<16x128xf32>
    %cst_8 = arith.constant dense<0.000000e+00> : vector<128xf32>
    %11 = vector.multi_reduction <add>, %10, %cst_8 [0] : vector<16x128xf32> to vector<128xf32>
    %12 = vector.shape_cast %11 : vector<128xf32> to vector<1x128xf32>
    %c0_9 = arith.constant 0 : index
    %c0_10 = arith.constant 0 : index
    %13 = memref.load %arg5[%c0_9, %c0_10] : memref<1x1xf32, #tpu.memory_space<smem>>
    %14 = vector.broadcast %13 : f32 to vector<1x128xf32>
    %15 = arith.addf %12, %14 : vector<1x128xf32>
    %c0_11 = arith.constant 0 : index
    %c0_12 = arith.constant 0 : index
    %16 = vector.load %arg6[%c0_11, %c0_12] : memref<1x128xf32, #tpu.memory_space<vmem>>, vector<1x128xf32>
    tpu.vector_store %arg6[%c0_11, %c0_12], %15 {strides = array<i32>} : memref<1x128xf32, #tpu.memory_space<vmem>>, vector<1x128xf32>,
    return
  }
  func.func @transform_0(%arg0: i32) -> (i32, i32) {
    %c0_i32 = arith.constant 0 : i32
    %c0_i32_0 = arith.constant 0 : i32
    return %c0_i32, %arg0 : i32, i32
  }
  func.func @transform_1(%arg0: i32) -> (i32, i32) {
    %c0_i32 = arith.constant 0 : i32
    %c0_i32_0 = arith.constant 0 : i32
    %c0_i32_1 = arith.constant 0 : i32
    return %c0_i32, %c0_i32_0 : i32, i32
  }
  func.func @transform_2(%arg0: i32) -> (i32, i32) {
    %c0_i32 = arith.constant 0 : i32
    %c0_i32_0 = arith.constant 0 : i32
    %c0_i32_1 = arith.constant 0 : i32
    return %c0_i32, %c0_i32_0 : i32, i32
  }
  func.func @transform_3(%arg0: i32) -> (i32, i32) {
    %c0_i32 = arith.constant 0 : i32
    %c0_i32_0 = arith.constant 0 : i32
    %c0_i32_1 = arith.constant 0 : i32
    return %c0_i32, %c0_i32_0 : i32, i32
  }
  func.func @transform_4(%arg0: i32) -> (i32, i32) {
    %c0_i32 = arith.constant 0 : i32
    %c0_i32_0 = arith.constant 0 : i32
    %c0_i32_1 = arith.constant 0 : i32
    return %c0_i32, %c0_i32_0 : i32, i32
  }
  func.func @transform_5(%arg0: i32) -> (i32, i32) {
    %c0_i32 = arith.constant 0 : i32
    %c0_i32_0 = arith.constant 0 : i32
    return %c0_i32, %arg0 : i32, i32
  }
}

</mosaic_0001>

<llo_original>
// kernel: tpu_custom_call.1
$region0: #{tpu_custom_call.1}
  #allocation0 [shape = 'u32[]', space=smem, size = 0x4, offset = 0x4, fixed_abs, tag = 'smem constant byte address 0x4 - core index']
  #allocation1 [shape = 'u32[144,128]{1,0:T(1,128)}', space=vmem, size = 0x12000, scoped, tag = 'internal scratch']
  #allocation2 [shape = 'f32[1,1]{1,0:T(1,128)S(6)}', space=smem, size = 0x200, scoped, tag = 'scoped memory for tpu_custom_call.1']
  %s0 = inlined_call_operand.vmem [shape: f32[4,8], index: 0, kind: input, shape index: {}]
  %s1 = inlined_call_operand.vmem [shape: f32[16,4], index: 1, kind: input, shape index: {}]
  %s2 = inlined_call_operand.vmem [shape: f32[16,1], index: 2, kind: input, shape index: {}]
  %s3 = inlined_call_operand.vmem [shape: f32[16,1], index: 3, kind: input, shape index: {}]
  %s4 = inlined_call_operand.<no memory space> [shape: f32[1,1], index: 4, kind: input, shape index: {}]
  %s5 = inlined_call_operand.hbm [shape: f32[1,8], index: 5, kind: output, shape index: {}]
  %s6 = sld [smem:[#allocation0]]
  $region30: #{tpu_custom_call.1} parent=0
    _
  %s8 = ssub.s32 1, %s6
  %s9 = scalar_select 0, %s8, %s6
  %10 = sst [smem:[#allocation2]] %s4
  $region1: #{tpu_custom_call.1} parent=0
    #allocation3 [shape = 'u8[512]{0}', space=vmem, size = 0x400, scoped, tag = 'output window, operand 0, single buffered']
    #allocation4 [shape = 's32[1]{0}', space=sflag, size = 0x4, scoped, tag = 'scoped memory for tpu_custom_call.1']
    %11 = vsyncpa [#allocation4], 0
    // Predicated region
    $region2: #{tpu_custom_call.1} parent=1 // pred_check
      _
    $region3: #{tpu_custom_call.1} parent=1 // pred_check_branch
      %13 = sbr.rel (0) target = $region5
    $region4: #{tpu_custom_call.1} parent=1 // pred_region
      _
    $region5: #{tpu_custom_call.1} parent=1 // pred_fallthru
      _
    // Predicated region
    $region6: #{tpu_custom_call.1} parent=1 // pred_check
      _
    $region7: #{tpu_custom_call.1} parent=1 // pred_check_branch
      %15 = sbr.rel (0) target = $region9
    $region8: #{tpu_custom_call.1} parent=1 // pred_region
      _
    $region9: #{tpu_custom_call.1} parent=1 // pred_fallthru
      _
    // Predicated region
    $region10: #{tpu_custom_call.1} parent=1 // pred_check
      _
    $region11: #{tpu_custom_call.1} parent=1 // pred_check_branch
      %17 = sbr.rel (0) target = $region13
    $region12: #{tpu_custom_call.1} parent=1 // pred_region
      _
    $region13: #{tpu_custom_call.1} parent=1 // pred_fallthru
      _
    // Predicated region
    $region14: #{tpu_custom_call.1} parent=1 // pred_check
      _
    $region15: #{tpu_custom_call.1} parent=1 // pred_check_branch
      %19 = sbr.rel (0) target = $region17
    $region16: #{tpu_custom_call.1} parent=1 // pred_region
      _
    $region17: #{tpu_custom_call.1} parent=1 // pred_fallthru
      _
    // Predicated region
    $region18: #{tpu_custom_call.1} parent=1 // pred_check
      _
    $region19: #{tpu_custom_call.1} parent=1 // pred_check_branch
      %21 = sbr.rel (0) target = $region21
    $region20: #{tpu_custom_call.1} parent=1 // pred_region
      _
    $region21: #{tpu_custom_call.1} parent=1 // pred_fallthru
      _
    %v22 = vld [vmem:[%s1] sm:$0xff]
    %v23 = vld [vmem:[%s1 + $0x8] sm:$0xff]
    %v24 = vld [vmem:[%s0] sm:$0xf]
    %v25 = vld [vmem:[%s2] sm:$0xff]
    %v26 = vld [vmem:[%s2 + $0x8] sm:$0xff]
    %28 = vset.pattern.permute.xlu0 0
    %29 = vperm.xlu0 %28, %v25
    %v30 = vpop.permute.xlu0 %29
    %33 = vset.pattern.permute.xlu0 0
    %34 = vperm.xlu0 %33, %v26
    %v35 = vpop.permute.xlu0 %34
    %vm37 = vcmask 31744
    %v39 = vsel %vm37, %v22, 0
    %v42 = vsel %vm37, %v23, 0
    %vm44 = vcmask 1043456
    %v46 = vsel %vm44, %v24, 0
    %48 = vmatprep.subr.mxu0 0.0
    %49 = vmatpush1.msra.mxu0 %v46
    %50 = vmatprep.subr.mxu0 0.0
    %51 = vmatpush1.msra.mxu0 0.0
    %52 = vmatprep.subr.mxu0 0.0
    %53 = vmatpush1.msra.mxu0 0.0
    %54 = vmatprep.subr.mxu0 0.0
    %55 = vmatpush1.msra.mxu0 0.0
    %56 = vmatprep.subr.mxu0 0.0
    %57 = vmatpush1.msra.mxu0 0.0
    %58 = vmatprep.subr.mxu0 0.0
    %59 = vmatpush1.msra.mxu0 0.0
    %60 = vmatprep.subr.mxu0 0.0
    %61 = vmatpush1.msra.mxu0 0.0
    %62 = vmatprep.subr.mxu0 0.0
    %63 = vmatpush1.msra.mxu0 0.0
    %64 = vmatprep.subr.mxu0 0.0
    %65 = vmatpush1.msra.mxu0 0.0
    %66 = vmatprep.subr.mxu0 0.0
    %67 = vmatpush1.msra.mxu0 0.0
    %68 = vmatprep.subr.mxu0 0.0
    %69 = vmatpush1.msra.mxu0 0.0
    %70 = vmatprep.subr.mxu0 0.0
    %71 = vmatpush1.msra.mxu0 0.0
    %72 = vmatprep.subr.mxu0 0.0
    %73 = vmatpush1.msra.mxu0 0.0
    %74 = vmatprep.subr.mxu0 0.0
    %75 = vmatpush1.msra.mxu0 0.0
    %76 = vmatprep.subr.mxu0 0.0
    %77 = vmatpush1.msra.mxu0 0.0
    %78 = vmatprep.subr.mxu0 0.0
    %79 = vmatpush1.msra.mxu0 0.0
    %80 = vmatprep.subr.mxu0 0.0
    %81 = vmatpush1.msra.mxu0 0.0
    %82 = vmatprep.subr.mxu0 0.0
    %83 = vmatpush1.msra.mxu0 0.0
    %84 = vmatprep.subr.mxu0 0.0
    %85 = vmatpush1.msra.mxu0 0.0
    %86 = vmatprep.subr.mxu0 0.0
    %87 = vmatpush1.msra.mxu0 0.0
    %88 = vmatprep.subr.mxu0 0.0
    %89 = vmatpush1.msra.mxu0 0.0
    %90 = vmatprep.subr.mxu0 0.0
    %91 = vmatpush1.msra.mxu0 0.0
    %92 = vmatprep.subr.mxu0 0.0
    %93 = vmatpush1.msra.mxu0 0.0
    %94 = vmatprep.subr.mxu0 0.0
    %95 = vmatpush1.msra.mxu0 0.0
    %96 = vmatprep.subr.mxu0 0.0
    %97 = vmatpush1.msra.mxu0 0.0
    %98 = vmatprep.subr.mxu0 0.0
    %99 = vmatpush1.msra.mxu0 0.0
    %100 = vmatprep.subr.mxu0 0.0
    %101 = vmatpush1.msra.mxu0 0.0
    %102 = vmatprep.subr.mxu0 0.0
    %103 = vmatpush1.msra.mxu0 0.0
    %104 = vmatprep.subr.mxu0 0.0
    %105 = vmatpush1.msra.mxu0 0.0
    %106 = vmatprep.subr.mxu0 0.0
    %107 = vmatpush1.msra.mxu0 0.0
    %108 = vmatprep.subr.mxu0 0.0
    %109 = vmatpush1.msra.mxu0 0.0
    %110 = vmatprep.subr.mxu0 0.0
    %111 = vmatpush1.msra.mxu0 0.0
    %112 = vmatprep.mubr.f32.mxu0 0.0
    %113 = vmatmul.mubr.f32.gmra.mrb[0].mxu0 %v39
    %v114 = vpop.f32.mrb[0].mxu0
    %v115 = vadd.f32 %v30, %v114
    %v116 = vpop.f32.mrb[0].mxu0
    %117 = vmatprep.mubr.f32.mxu0 0.0
    %118 = vmatmul.mubr.f32.gmra.mrb[0].mxu0 %v42
    %v119 = vpop.f32.mrb[0].mxu0
    %v120 = vadd.f32 %v35, %v119
    %v121 = vpop.f32.mrb[0].mxu0
    %122 = vdwg.mxu0
    %v123 = vmax.f32 %v115, 0.0
    %v124 = vmax.f32 %v120, 0.0
    %v125 = vld [vmem:[%s3] sm:$0xff]
    %v126 = vld [vmem:[%s3 + $0x8] sm:$0xff]
    %128 = vset.pattern.permute.xlu0 0
    %129 = vperm.xlu0 %128, %v125
    %v130 = vpop.permute.xlu0 %129
    %133 = vset.pattern.permute.xlu0 0
    %134 = vperm.xlu0 %133, %v126
    %v135 = vpop.permute.xlu0 %134
    %v137 = vmul.f32 %v123, %v130
    %v138 = vmul.f32 %v124, %v135
    %v139 = vadd.f32 %v137, %v138
    %v140 = vrot.slane %v139, 4
    %v141 = vadd.f32 %v139, %v140
    %v142 = vrot.slane %v141, 2
    %v143 = vadd.f32 %v141, %v142
    %v144 = vrot.slane %v143, 1
    %v145 = vadd.f32 %v143, %v144
    %s146 = sld [smem:[#allocation2]]
    %v147 = vstv %s146
    %v148 = vadd.f32 %v145, %v147
    %149 = vst [vmem:[#allocation3] sm:$0x1] %v148
    // Predicated region
    $region22: #{tpu_custom_call.1} parent=1 // pred_check
      _
    $region23: #{tpu_custom_call.1} parent=1 // pred_check_branch
      %151 = sbr.rel (0) target = $region25
    $region24: #{tpu_custom_call.1} parent=1 // pred_region
      %s153 = ssub.s32 16, 16
      %154 = vsyncadd [#allocation4], %s153
      %s156 = sshll.u32 [#allocation3], 4
      %s157 = int_to_ptr.vmem [resolvable:$true] %s156
      %159 = dma.vmem_to_hbm [thread:$0]  %s157, 16, %s5, [#allocation4]
    $region25: #{tpu_custom_call.1} parent=1 // pred_fallthru
      _
    // Predicated region
    $region26: #{tpu_custom_call.1} parent=1 // pred_check
      _
    $region27: #{tpu_custom_call.1} parent=1 // pred_check_branch
      %161 = sbr.rel (0) target = $region29
    $region28: #{tpu_custom_call.1} parent=1 // pred_region
      %162 = dma.done [#allocation4], 16
    $region29: #{tpu_custom_call.1} parent=1 // pred_fallthru
      _
    %163 = vsyncpa [#allocation4], 1

</llo_original>
